<compile_context>
chip_gen: v7x
topology: tpu7x:2x2x1
jax: 0.10.0
libtpu: 0.0.40
codegen_flags: <defaults>
</compile_context>

<pallas_src>
import jax
import jax.numpy as jnp
from jax.experimental import pallas as pl
from jax.experimental.pallas import tpu as pltpu


_LANE = 128
_SUBLANE = 8
_WHOLE_K_VMEM_BUDGET = 24 << 20      # double-buffered block budget (v7x-safe)
_FAST_PATH_ELEMS = 8 * 512 * 256     # below ~1 tile of MXU work -> plain XLA dot


def _round_up(v, m):
    return ((v + m - 1) // m) * m


def _largest_divisor(total, grain, cap):
    """Largest multiple-of-`grain` divisor of `total` not exceeding `cap`.
    `total` must be a multiple of `grain`."""
    best = grain
    d = grain
    limit = min(total, cap)
    while d <= limit:
        if total % d == 0:
            best = d
        d += grain
    return best


def _linear_whole_k_kernel(x_ref, w_ref, b_ref, o_ref):
    # x_ref: [tm, Kp], w_ref: [Kp, tn] (K-major), b_ref: [1, tn], o_ref: [tm, tn]
    acc = jnp.dot(x_ref[...], w_ref[...], preferred_element_type=jnp.float32)
    o_ref[...] = (acc + b_ref[...].astype(jnp.float32)).astype(o_ref.dtype)


def _linear_tiled_k_kernel(x_ref, w_ref, b_ref, o_ref, acc_ref):
    # Fallback for very large in_features: K-innermost accumulator.
    @pl.when(pl.program_id(2) == 0)
    def _():
        acc_ref[...] = jnp.zeros_like(acc_ref)

    acc_ref[...] += jnp.dot(x_ref[...], w_ref[...],
                            preferred_element_type=jnp.float32)

    @pl.when(pl.program_id(2) == pl.num_programs(2) - 1)
    def _():
        o_ref[...] = (acc_ref[...] + b_ref[...].astype(jnp.float32)).astype(o_ref.dtype)


def _pallas_linear(x, w_km, b_row, num_classes):
    """x: [B, K] unpadded activations, w_km: [Kp, Np] K-major zero-padded weight,
    b_row: [1, Np] zero-padded bias. Returns [B, num_classes]."""
    B, K = x.shape
    Kp, Np = w_km.shape
    N = num_classes
    itemsize = jnp.dtype(x.dtype).itemsize

    Bp = _round_up(B, _SUBLANE)

    # ---- tile selection: divisors of the grain-padded dims (no extra padding) ----
    tm = _largest_divisor(Bp, _SUBLANE, 256)
    tn = _largest_divisor(Np, _LANE, 512)

    # v7x megacore: guarantee >= 2 'parallel' tiles when the shape allows it.
    if (Bp // tm) * (Np // tn) < 2:
        if Np >= 2 * _LANE:
            tn = _largest_divisor(Np, _LANE, Np // 2)
        elif Bp >= 2 * _SUBLANE:
            tm = _largest_divisor(Bp, _SUBLANE, Bp // 2)

    # Pad activations only (weight/bias were prepped once at init).
    xp = jnp.pad(x, ((0, Bp - B), (0, Kp - K))) if (Bp != B or Kp != K) else x

    def block_bytes(tk):
        return (tm * tk + tk * tn + tn + tm * tn) * itemsize

    whole_k = 2 * block_bytes(Kp) <= _WHOLE_K_VMEM_BUDGET

    if whole_k:
        # j outer / i inner: the (large) weight block stays resident across the
        # batch tiles, so W is streamed from HBM exactly once.
        grid = (Np // tn, Bp // tm)
        in_specs = [
            pl.BlockSpec((tm, Kp), lambda j, i: (i, 0)),   # activations
            pl.BlockSpec((Kp, tn), lambda j, i: (0, j)),   # K-major weight
            pl.BlockSpec((1, tn), lambda j, i: (0, j)),    # bias
        ]
        out_spec = pl.BlockSpec((tm, tn), lambda j, i: (i, j))
        scratch = []
        kernel = _linear_whole_k_kernel
        semantics = ("parallel", "parallel")
        vmem_bytes = 2 * block_bytes(Kp)
        bytes_accessed = (Bp * Kp * (Np // tn)   # x re-read once per j tile
                          + Kp * Np              # weight read once
                          + Np + Bp * Np) * itemsize
    else:
        tk = _largest_divisor(Kp, _LANE, 2048)
        while 2 * block_bytes(tk) + tm * tn * 4 > _WHOLE_K_VMEM_BUDGET and tk > _LANE:
            tk = _largest_divisor(Kp, _LANE, tk - _LANE)
        grid = (Np // tn, Bp // tm, Kp // tk)
        in_specs = [
            pl.BlockSpec((tm, tk), lambda j, i, k: (i, k)),
            pl.BlockSpec((tk, tn), lambda j, i, k: (k, j)),
            pl.BlockSpec((1, tn), lambda j, i, k: (0, j)),
        ]
        out_spec = pl.BlockSpec((tm, tn), lambda j, i, k: (i, j))
        scratch = [pltpu.VMEM((tm, tn), jnp.float32)]
        kernel = _linear_tiled_k_kernel
        semantics = ("parallel", "parallel", "arbitrary")
        vmem_bytes = 2 * block_bytes(tk) + tm * tn * 4
        bytes_accessed = (Bp * Kp * (Np // tn)
                          + Kp * Np * (Bp // tm)
                          + Np * (Bp // tm) + Bp * Np) * itemsize

    vmem_limit = int(min(max(2 * vmem_bytes, 8 << 20), 48 << 20))

    cost = pl.CostEstimate(
        flops=2 * Bp * Kp * Np,
        transcendentals=0,
        bytes_accessed=int(bytes_accessed),
    )

    out_padded = pl.pallas_call(
        kernel,
        out_shape=jax.ShapeDtypeStruct((Bp, Np), x.dtype),
        grid_spec=pltpu.PrefetchScalarGridSpec(
            num_scalar_prefetch=0,
            grid=grid,
            in_specs=in_specs,
            out_specs=out_spec,
            scratch_shapes=scratch,
        ),
        compiler_params=pltpu.CompilerParams(
            dimension_semantics=semantics,
            vmem_limit_bytes=vmem_limit,
        ),
        cost_estimate=cost,
    )(xp, w_km, b_row)

    return out_padded[:B, :N]


def make_inner_deconf(weight, bias, *, force_pallas=False):
    """One-time parameter prep for the GODIN InnerDeconf head (h = nn.Linear).

    weight: [num_classes, in_features] (PyTorch layout), bias: [num_classes].
    Returns a jitted forward(x) computing x @ weight.T + bias.
    """
    N, K = weight.shape
    Kp = _round_up(K, _LANE)
    Np = _round_up(N, _LANE)

    # One-time prep: zero-pad to the (8,128) grain and transpose to K-major so
    # the kernel runs a canonical [tm,Kp] @ [Kp,tn] MXU contraction with no
    # per-tile transpose and no per-call weight padding.
    w_km = jnp.asarray(jnp.pad(weight, ((0, Np - N), (0, Kp - K))).T)   # [Kp, Np]
    b_row = jnp.asarray(jnp.pad(bias, (0, Np - N)).reshape(1, Np))      # [1,  Np]

    @jax.jit
    def forward(x):
        B = x.shape[0]
        if (not force_pallas) and B * Kp * Np <= _FAST_PATH_ELEMS:
            # Small-problem fast path: pallas_call fixed overhead would dominate.
            return x @ weight.T + bias
        return _pallas_linear(x, w_km, b_row, N)

    return forward


def init_inner_deconf_params(key, in_features, num_classes, dtype=jnp.float32):
    """Matches InnerDeconf.init_weights():
       - weight: kaiming_normal_ (fan_in mode, relu gain) -> std = sqrt(2 / fan_in)
       - bias:   zeros
    """
    std = (2.0 / in_features) ** 0.5
    weight = (std * jax.random.normal(key, (num_classes, in_features))).astype(dtype)
    bias = jnp.zeros((num_classes,), dtype=dtype)
    return weight, bias


if __name__ == "__main__":
    key = jax.random.PRNGKey(0)
    k_x, k_w, k_x2, k_w2 = jax.random.split(key, 4)

    # --- module-sized check (B=2, in_features=32, num_classes=10), forced
    #     through the Pallas kernel so the kernel path itself is exercised ---
    batch, in_features, num_classes = 2, 32, 10
    x = jax.random.normal(k_x, (batch, in_features), dtype=jnp.float32)
    weight, bias = init_inner_deconf_params(k_w, in_features, num_classes)

    fwd = make_inner_deconf(weight, bias, force_pallas=True)
    out = fwd(x)
    jax.block_until_ready(out)

    ref = x @ weight.T + bias
    assert out.shape == (batch, num_classes)
    assert jnp.allclose(out, ref, atol=1e-5, rtol=1e-5), "mismatch vs reference (small)"

    # --- multi-tile check: whole-K fused contraction, N split across tiles ---
    batch2, in2, classes2 = 16, 1024, 384
    x2 = jax.random.normal(k_x2, (batch2, in2), dtype=jnp.float32)
    w2, b2 = init_inner_deconf_params(k_w2, in2, classes2)

    fwd2 = make_inner_deconf(w2, b2)
    out2 = fwd2(x2)
    jax.block_until_ready(out2)

    ref2 = x2 @ w2.T + b2
    assert out2.shape == (batch2, classes2)
    assert jnp.allclose(out2, ref2, atol=1e-3, rtol=1e-3), "mismatch vs reference (tiled)"

    print("KERNEL_OK")
</pallas_src>

<mosaic_0001>
module attributes {stable_mosaic.version = 11 : i64} {
  func.func @_linear_whole_k_kernel(%arg0: i32, %arg1: i32, %arg2: memref<8x128xf32, #tpu.memory_space<vmem>>, %arg3: memref<128x128xf32, #tpu.memory_space<vmem>>, %arg4: memref<1x128xf32, #tpu.memory_space<vmem>>, %arg5: memref<8x128xf32, #tpu.memory_space<vmem>>) attributes {dimension_semantics = [#tpu.dimension_semantics<parallel>, #tpu.dimension_semantics<parallel>], iteration_bounds = array<i64: 1, 1>, scalar_prefetch = 0 : i64, scratch_operands = 0 : i64, tpu.core_type = #tpu.core_type<tc>, window_params = [{transform_indices = @transform_0, window_bounds = array<i64: 8, 128>}, {transform_indices = @transform_1, window_bounds = array<i64: 128, 128>}, {transform_indices = @transform_2, window_bounds = array<i64: 1, 128>}, {transform_indices = @transform_3, window_bounds = array<i64: 8, 128>}]} {
    %c0 = arith.constant 0 : index
    %c0_0 = arith.constant 0 : index
    %0 = vector.load %arg2[%c0, %c0_0] : memref<8x128xf32, #tpu.memory_space<vmem>>, vector<8x128xf32>
    %c0_1 = arith.constant 0 : index
    %c0_2 = arith.constant 0 : index
    %1 = vector.load %arg3[%c0_1, %c0_2] : memref<128x128xf32, #tpu.memory_space<vmem>>, vector<128x128xf32>
    %cst = arith.constant dense<0.000000e+00> : vector<8x128xf32>
    %2 = tpu.matmul %0, %1, %cst {dimension_numbers = #tpu.dot_dimension_numbers<[1], [0], [0], [1], [0, 0, 1, 1], [], []>} : vector<8x128xf32>, vector<128x128xf32>, vector<8x128xf32> -> vector<8x128xf32>
    %c0_3 = arith.constant 0 : index
    %c0_4 = arith.constant 0 : index
    %3 = vector.load %arg4[%c0_3, %c0_4] : memref<1x128xf32, #tpu.memory_space<vmem>>, vector<1x128xf32>
    %4 = vector.broadcast %3 : vector<1x128xf32> to vector<8x128xf32>
    %5 = arith.addf %2, %4 : vector<8x128xf32>
    %c0_5 = arith.constant 0 : index
    %c0_6 = arith.constant 0 : index
    %6 = vector.load %arg5[%c0_5, %c0_6] : memref<8x128xf32, #tpu.memory_space<vmem>>, vector<8x128xf32>
    tpu.vector_store %arg5[%c0_5, %c0_6], %5 {strides = array<i32>} : memref<8x128xf32, #tpu.memory_space<vmem>>, vector<8x128xf32>,
    return
  }
  func.func @transform_0(%arg0: i32, %arg1: i32) -> (i32, i32) {
    %c0_i32 = arith.constant 0 : i32
    %c0_i32_0 = arith.constant 0 : i32
    return %arg1, %c0_i32 : i32, i32
  }
  func.func @transform_1(%arg0: i32, %arg1: i32) -> (i32, i32) {
    %c0_i32 = arith.constant 0 : i32
    %c0_i32_0 = arith.constant 0 : i32
    return %c0_i32, %arg0 : i32, i32
  }
  func.func @transform_2(%arg0: i32, %arg1: i32) -> (i32, i32) {
    %c0_i32 = arith.constant 0 : i32
    %c0_i32_0 = arith.constant 0 : i32
    return %c0_i32, %arg0 : i32, i32
  }
  func.func @transform_3(%arg0: i32, %arg1: i32) -> (i32, i32) {
    %c0_i32 = arith.constant 0 : i32
    return %arg1, %arg0 : i32, i32
  }
}

</mosaic_0001>

<llo_original>
// kernel: forward.1
$region0: #{forward.1}
  #allocation0 [shape = 'u32[]', space=smem, size = 0x4, offset = 0x4, fixed_abs, tag = 'smem constant byte address 0x4 - core index']
  #allocation1 [shape = 'u32[144,128]{1,0:T(1,128)}', space=vmem, size = 0x12000, scoped, tag = 'internal scratch']
  %s0 = inlined_call_operand.vmem [shape: f32[8,128], index: 0, kind: input, shape index: {}]
  %s1 = inlined_call_operand.hbm [shape: f32[128,128], index: 1, kind: input, shape index: {}]
  %s2 = inlined_call_operand.vmem [shape: f32[1,128], index: 2, kind: input, shape index: {}]
  %s3 = inlined_call_operand.vmem [shape: f32[8,128], index: 3, kind: output, shape index: {}]
  %s4 = sld [smem:[#allocation0]]
  $region26: #{forward.1} parent=0
    _
  %s6 = ssub.s32 1, %s4
  %s7 = scalar_select 0, %s6, %s4
  $region1: #{forward.1} parent=0
    #allocation2 [shape = 'u8[65536]{0}', space=vmem, size = 0x10000, scoped, tag = 'input window, operand 1, single buffered']
    #allocation3 [shape = 's32[1]{0}', space=sflag, size = 0x4, scoped, tag = 'scoped memory for forward.1']
    %8 = vsyncpa [#allocation3], 0
    // Predicated region
    $region2: #{forward.1} parent=1 // pred_check
      _
    $region3: #{forward.1} parent=1 // pred_check_branch
      %10 = sbr.rel (0) target = $region5
    $region4: #{forward.1} parent=1 // pred_region
      _
    $region5: #{forward.1} parent=1 // pred_fallthru
      _
    // Predicated region
    $region6: #{forward.1} parent=1 // pred_check
      _
    $region7: #{forward.1} parent=1 // pred_check_branch
      %12 = sbr.rel (0) target = $region9
    $region8: #{forward.1} parent=1 // pred_region
      %s14 = ssub.s32 2048, 2048
      %15 = vsyncadd [#allocation3], %s14
      %s16 = sshll.u32 [#allocation2], 4
      %s17 = int_to_ptr.vmem [resolvable:$true] %s16
      %22 = dma.hbm_to_vmem [thread:$0]  %s1, 2048, %s17, [#allocation3], 128, 128, 8
    $region9: #{forward.1} parent=1 // pred_fallthru
      _
    // Predicated region
    $region10: #{forward.1} parent=1 // pred_check
      _
    $region11: #{forward.1} parent=1 // pred_check_branch
      %24 = sbr.rel (0) target = $region13
    $region12: #{forward.1} parent=1 // pred_region
      _
    $region13: #{forward.1} parent=1 // pred_fallthru
      _
    // Predicated region
    $region14: #{forward.1} parent=1 // pred_check
      _
    $region15: #{forward.1} parent=1 // pred_check_branch
      %26 = sbr.rel (0) target = $region17
    $region16: #{forward.1} parent=1 // pred_region
      %27 = dma.done [#allocation3], 2048
    $region17: #{forward.1} parent=1 // pred_fallthru
      _
    %v28 = vld [vmem:[%s0] sm:$0xff]
    %v29 = vld [vmem:[#allocation2] sm:$0xff]
    %v30 = vld [vmem:[#allocation2 + $0x8] sm:$0xff]
    %v31 = vld [vmem:[#allocation2 + $0x10] sm:$0xff]
    %v32 = vld [vmem:[#allocation2 + $0x18] sm:$0xff]
    %v33 = vld [vmem:[#allocation2 + $0x20] sm:$0xff]
    %v34 = vld [vmem:[#allocation2 + $0x28] sm:$0xff]
    %v35 = vld [vmem:[#allocation2 + $0x30] sm:$0xff]
    %v36 = vld [vmem:[#allocation2 + $0x38] sm:$0xff]
    %v37 = vld [vmem:[#allocation2 + $0x40] sm:$0xff]
    %v38 = vld [vmem:[#allocation2 + $0x48] sm:$0xff]
    %v39 = vld [vmem:[#allocation2 + $0x50] sm:$0xff]
    %v40 = vld [vmem:[#allocation2 + $0x58] sm:$0xff]
    %v41 = vld [vmem:[#allocation2 + $0x60] sm:$0xff]
    %v42 = vld [vmem:[#allocation2 + $0x68] sm:$0xff]
    %v43 = vld [vmem:[#allocation2 + $0x70] sm:$0xff]
    %v44 = vld [vmem:[#allocation2 + $0x78] sm:$0xff]
    %v45 = vld [vmem:[%s2] sm:$0x1]
    %v47 = vlaneseq
    %v48 = vshrl.u32 %v47, 7
    %v49 = vsub.s32 0, %v48
    %v50 = vrot.slane %v45, %v49
    %52 = vmatprep.subr.mxu0 0.0
    %53 = vmatpush1.msra.mxu0 %v29
    %54 = vmatprep.subr.mxu0 0.0
    %55 = vmatpush1.msra.mxu0 %v30
    %56 = vmatprep.subr.mxu0 0.0
    %57 = vmatpush1.msra.mxu0 %v31
    %58 = vmatprep.subr.mxu0 0.0
    %59 = vmatpush1.msra.mxu0 %v32
    %60 = vmatprep.subr.mxu0 0.0
    %61 = vmatpush1.msra.mxu0 %v33
    %62 = vmatprep.subr.mxu0 0.0
    %63 = vmatpush1.msra.mxu0 %v34
    %64 = vmatprep.subr.mxu0 0.0
    %65 = vmatpush1.msra.mxu0 %v35
    %66 = vmatprep.subr.mxu0 0.0
    %67 = vmatpush1.msra.mxu0 %v36
    %68 = vmatprep.subr.mxu0 0.0
    %69 = vmatpush1.msra.mxu0 %v37
    %70 = vmatprep.subr.mxu0 0.0
    %71 = vmatpush1.msra.mxu0 %v38
    %72 = vmatprep.subr.mxu0 0.0
    %73 = vmatpush1.msra.mxu0 %v39
    %74 = vmatprep.subr.mxu0 0.0
    %75 = vmatpush1.msra.mxu0 %v40
    %76 = vmatprep.subr.mxu0 0.0
    %77 = vmatpush1.msra.mxu0 %v41
    %78 = vmatprep.subr.mxu0 0.0
    %79 = vmatpush1.msra.mxu0 %v42
    %80 = vmatprep.subr.mxu0 0.0
    %81 = vmatpush1.msra.mxu0 %v43
    %82 = vmatprep.subr.mxu0 0.0
    %83 = vmatpush1.msra.mxu0 %v44
    %84 = vmatprep.subr.mxu0 0.0
    %85 = vmatpush1.msra.mxu0 0.0
    %86 = vmatprep.subr.mxu0 0.0
    %87 = vmatpush1.msra.mxu0 0.0
    %88 = vmatprep.subr.mxu0 0.0
    %89 = vmatpush1.msra.mxu0 0.0
    %90 = vmatprep.subr.mxu0 0.0
    %91 = vmatpush1.msra.mxu0 0.0
    %92 = vmatprep.subr.mxu0 0.0
    %93 = vmatpush1.msra.mxu0 0.0
    %94 = vmatprep.subr.mxu0 0.0
    %95 = vmatpush1.msra.mxu0 0.0
    %96 = vmatprep.subr.mxu0 0.0
    %97 = vmatpush1.msra.mxu0 0.0
    %98 = vmatprep.subr.mxu0 0.0
    %99 = vmatpush1.msra.mxu0 0.0
    %100 = vmatprep.subr.mxu0 0.0
    %101 = vmatpush1.msra.mxu0 0.0
    %102 = vmatprep.subr.mxu0 0.0
    %103 = vmatpush1.msra.mxu0 0.0
    %104 = vmatprep.subr.mxu0 0.0
    %105 = vmatpush1.msra.mxu0 0.0
    %106 = vmatprep.subr.mxu0 0.0
    %107 = vmatpush1.msra.mxu0 0.0
    %108 = vmatprep.subr.mxu0 0.0
    %109 = vmatpush1.msra.mxu0 0.0
    %110 = vmatprep.subr.mxu0 0.0
    %111 = vmatpush1.msra.mxu0 0.0
    %112 = vmatprep.subr.mxu0 0.0
    %113 = vmatpush1.msra.mxu0 0.0
    %114 = vmatprep.subr.mxu0 0.0
    %115 = vmatpush1.msra.mxu0 0.0
    %116 = vmatprep.mubr.f32.mxu0 0.0
    %117 = vmatmul.mubr.f32.gmra.mrb[0].mxu0 %v28
    %v118 = vpop.f32.mrb[0].mxu0
    %v119 = vadd.f32 %v50, %v118
    %v120 = vpop.f32.mrb[0].mxu0
    %121 = vdwg.mxu0
    %122 = vst [vmem:[%s3] sm:$0xff] %v119
    // Predicated region
    $region18: #{forward.1} parent=1 // pred_check
      _
    $region19: #{forward.1} parent=1 // pred_check_branch
      %124 = sbr.rel (0) target = $region21
    $region20: #{forward.1} parent=1 // pred_region
      _
    $region21: #{forward.1} parent=1 // pred_fallthru
      _
    // Predicated region
    $region22: #{forward.1} parent=1 // pred_check
      _
    $region23: #{forward.1} parent=1 // pred_check_branch
      %126 = sbr.rel (0) target = $region25
    $region24: #{forward.1} parent=1 // pred_region
      _
    $region25: #{forward.1} parent=1 // pred_fallthru
      _
    %127 = vsyncpa [#allocation3], 1

</llo_original>
